<compile_context>
chip_gen: v6e
topology: v6e:2x2x1
jax: 0.10.0
libtpu: 0.0.40
codegen_flags: <defaults>
</compile_context>

<pallas_src>
import functools

import jax
import jax.numpy as jnp
import numpy as np
from jax import lax
from jax.experimental import pallas as pl
from jax.experimental.pallas import tpu as pltpu


# -----------------------------------------------------------------------------
# Pallas kernel: in-VMEM im2col (shifted flat slices) + MXU GEMM (bf16 in,
# f32 accumulate) + folded BN + LeakyReLU(0.1)
# -----------------------------------------------------------------------------
def convblock_kernel(x_ref, w_ref, scale_ref, bias_ref, o_ref, *, KH, KW, Wp, L):
    # x_ref:     (1, Cin, Hp*Wp)     bf16  flattened zero-padded image
    # w_ref:     (KH*KW, Cout, Cin)  bf16  conv weight, (kh,kw)-major
    # scale_ref: (Cout, 1)           f32   folded BN scale  (gamma / sqrt(var+eps))
    # bias_ref:  (Cout, 1)           f32   folded BN bias   (beta - mean*scale)
    # o_ref:     (1, Cout, L)        f32   dense stride-1 output, flat idx = ho*Wp + wo
    cout = o_ref.shape[1]
    acc = jnp.zeros((cout, L), jnp.float32)
    # Static unrolled loop over the KH*KW taps; each tap is one small MXU
    # matmul on a shifted (in-VMEM) view of the flattened image.
    for kh in range(KH):
        for kw in range(KW):
            off = kh * Wp + kw                     # static element offset
            slab = x_ref[0, :, pl.ds(off, L)]      # (Cin, L) shifted view (VMEM)
            w_kk = w_ref[kh * KW + kw]             # (Cout, Cin)
            acc = acc + jnp.dot(w_kk, slab, preferred_element_type=jnp.float32)
    y = acc * scale_ref[...] + bias_ref[...]       # folded BatchNorm (eval), f32
    o_ref[0, :, :] = jnp.where(y >= 0.0, y, 0.1 * y).astype(o_ref.dtype)


# -----------------------------------------------------------------------------
# Wrapper
# -----------------------------------------------------------------------------
@functools.partial(jax.jit, static_argnames=("stride", "pad"))
def conv_block_forward(x_nchw, weight, gamma, beta, running_mean, running_var,
                       *, stride, pad, eps=1e-5):
    """Forward of ConvBlock.  x_nchw: [N, Cin, H, W] float32."""
    N, Cin, H, W = x_nchw.shape
    Cout, _, KH, KW = weight.shape
    Hp, Wp = H + 2 * pad, W + 2 * pad
    Ho1, Wo1 = Hp - KH + 1, Wp - KW + 1            # dense (stride-1) output size
    Ho = (H + 2 * pad - KH) // stride + 1          # true strided output size
    Wo = (W + 2 * pad - KW) // stride + 1
    # Flat dense-output length.  Note (KH-1)*Wp + (KW-1) + L == Hp*Wp exactly,
    # so every shifted slab stays inside the flattened padded image: no padding
    # of the contraction/lane dims is needed anywhere.
    L = (Ho1 - 1) * Wp + Wo1

    # ---- glue: spatial zero-pad, flatten per image, cast operands to bf16 ----
    x_flat = jnp.pad(x_nchw, ((0, 0), (0, 0), (pad, pad), (pad, pad)))
    x_flat = x_flat.reshape(N, Cin, Hp * Wp).astype(jnp.bfloat16)

    # conv weight: (Cout, Cin, KH, KW) -> (KH*KW, Cout, Cin), bf16
    w_r = jnp.transpose(weight, (2, 3, 0, 1)).reshape(KH * KW, Cout, Cin)
    w_r = w_r.astype(jnp.bfloat16)

    # fold BatchNorm (eval semantics) into per-channel scale / bias, kept f32
    scale = (gamma / jnp.sqrt(running_var + eps)).astype(jnp.float32).reshape(Cout, 1)
    bias = (beta.astype(jnp.float32).reshape(Cout, 1)
            - running_mean.astype(jnp.float32).reshape(Cout, 1) * scale)

    kernel = functools.partial(convblock_kernel, KH=KH, KW=KW, Wp=Wp, L=L)

    out_flat = pl.pallas_call(
        kernel,
        out_shape=jax.ShapeDtypeStruct((N, Cout, L), jnp.float32),
        grid_spec=pltpu.PrefetchScalarGridSpec(
            num_scalar_prefetch=0,
            grid=(N,),  # >=2 parallel steps -> both v7x TensorCores busy
            in_specs=[
                pl.BlockSpec((1, Cin, Hp * Wp), lambda n: (n, 0, 0)),
                pl.BlockSpec((KH * KW, Cout, Cin), lambda n: (0, 0, 0)),
                pl.BlockSpec((Cout, 1), lambda n: (0, 0)),
                pl.BlockSpec((Cout, 1), lambda n: (0, 0)),
            ],
            out_specs=pl.BlockSpec((1, Cout, L), lambda n: (n, 0, 0)),
        ),
        compiler_params=pltpu.CompilerParams(
            dimension_semantics=("parallel",),
            # Safe on every generation (v5e/v6e physical 128 MiB, v7x 64 MiB);
            # raises the v5e 16 MiB scoped default so larger images still fit.
            vmem_limit_bytes=32 * 1024 * 1024,
        ),
    )(x_flat, w_r, scale, bias)

    # ---- glue: un-flatten dense output, drop the KW-1 junk columns ----
    y = jnp.pad(out_flat, ((0, 0), (0, 0), (0, Ho1 * Wp - L)))
    y = y.reshape(N, Cout, Ho1, Wp)[:, :, :, :Wo1]     # [N, Cout, Ho1, Wo1]
    if stride > 1:
        # TODO(synk): stride>1 is handled by computing the dense stride-1 conv
        # and subsampling; a stride-aware kernel would avoid the extra compute.
        y = y[:, :, ::stride, ::stride]
    return y[:, :, :Ho, :Wo]                           # [N, Cout, Ho, Wo]


# -----------------------------------------------------------------------------
# Pure-JAX reference (mirrors kernel numerics: bf16 operands, f32 accumulation)
# -----------------------------------------------------------------------------
def conv_block_reference(x_nchw, weight, gamma, beta, running_mean, running_var,
                         *, stride, pad, eps=1e-5):
    y = lax.conv_general_dilated(
        x_nchw.astype(jnp.bfloat16), weight.astype(jnp.bfloat16),
        window_strides=(stride, stride),
        padding=((pad, pad), (pad, pad)),
        dimension_numbers=("NCHW", "OIHW", "NCHW"),
        preferred_element_type=jnp.float32,
    )
    scale = gamma / jnp.sqrt(running_var + eps)
    bias = beta - running_mean * scale
    y = y * scale[None, :, None, None] + bias[None, :, None, None]
    return jnp.where(y >= 0.0, y, 0.1 * y)


if __name__ == "__main__":
    # ConvBlock(in_channels=4, out_channels=8, kernel_size=3, stride=1, pad=1)
    N, Cin, H, W = 2, 4, 16, 16
    Cout, K, stride, pad = 8, 3, 1, 1

    key = jax.random.PRNGKey(0)
    kx, kw, kg, kb, km, kv = jax.random.split(key, 6)

    x = jax.random.normal(kx, (N, Cin, H, W), jnp.float32)
    weight = jax.random.normal(kw, (Cout, Cin, K, K), jnp.float32) * 0.1
    gamma = 1.0 + 0.1 * jax.random.normal(kg, (Cout,), jnp.float32)
    beta = 0.1 * jax.random.normal(kb, (Cout,), jnp.float32)
    running_mean = 0.1 * jax.random.normal(km, (Cout,), jnp.float32)
    running_var = jnp.abs(1.0 + 0.1 * jax.random.normal(kv, (Cout,), jnp.float32))

    out = conv_block_forward(x, weight, gamma, beta, running_mean, running_var,
                             stride=stride, pad=pad)
    out = jax.block_until_ready(out)

    ref = conv_block_reference(x, weight, gamma, beta, running_mean, running_var,
                               stride=stride, pad=pad)
    np.testing.assert_allclose(np.asarray(out), np.asarray(ref),
                               rtol=1e-3, atol=1e-3)

    print("KERNEL_OK")
</pallas_src>

<mosaic_0001>
module attributes {stable_mosaic.version = 11 : i64} {
  func.func @convblock_kernel(%arg0: i32, %arg1: memref<1x4x324xbf16, #tpu.memory_space<vmem>>, %arg2: memref<9x8x4xbf16, #tpu.memory_space<vmem>>, %arg3: memref<8x1xf32, #tpu.memory_space<vmem>>, %arg4: memref<8x1xf32, #tpu.memory_space<vmem>>, %arg5: memref<1x8x286xf32, #tpu.memory_space<vmem>>) attributes {dimension_semantics = [#tpu.dimension_semantics<parallel>], iteration_bounds = array<i64: 2>, scalar_prefetch = 0 : i64, scratch_operands = 0 : i64, tpu.core_type = #tpu.core_type<tc>, window_params = [{transform_indices = @transform_0, window_bounds = array<i64: 1, 4, 324>}, {pipeline_mode = #tpu.pipeline_mode<synchronous>, transform_indices = @transform_1, window_bounds = array<i64: 9, 8, 4>}, {pipeline_mode = #tpu.pipeline_mode<synchronous>, transform_indices = @transform_2, window_bounds = array<i64: 8, 1>}, {pipeline_mode = #tpu.pipeline_mode<synchronous>, transform_indices = @transform_3, window_bounds = array<i64: 8, 1>}, {transform_indices = @transform_4, window_bounds = array<i64: 1, 8, 286>}]} {
    %cst = arith.constant 0.000000e+00 : f32
    %0 = vector.broadcast %cst : f32 to vector<8x286xf32>
    %c0 = arith.constant 0 : index
    %c0_0 = arith.constant 0 : index
    %c0_1 = arith.constant 0 : index
    %1 = vector.load %arg1[%c0, %c0_0, %c0_1] : memref<1x4x324xbf16, #tpu.memory_space<vmem>>, vector<1x4x286xbf16>
    %2 = vector.shape_cast %1 : vector<1x4x286xbf16> to vector<4x286xbf16>
    %c0_2 = arith.constant 0 : index
    %c0_3 = arith.constant 0 : index
    %c0_4 = arith.constant 0 : index
    %3 = vector.load %arg2[%c0_2, %c0_3, %c0_4] : memref<9x8x4xbf16, #tpu.memory_space<vmem>>, vector<1x8x4xbf16>
    %4 = vector.shape_cast %3 : vector<1x8x4xbf16> to vector<8x4xbf16>
    %cst_5 = arith.constant dense<0.000000e+00> : vector<8x286xf32>
    %5 = tpu.matmul %4, %2, %cst_5 {dimension_numbers = #tpu.dot_dimension_numbers<[1], [0], [0], [1], [0, 0, 1, 1], [], []>} : vector<8x4xbf16>, vector<4x286xbf16>, vector<8x286xf32> -> vector<8x286xf32>
    %6 = arith.addf %0, %5 : vector<8x286xf32>
    %c0_6 = arith.constant 0 : index
    %c0_7 = arith.constant 0 : index
    %c1 = arith.constant 1 : index
    %7 = vector.load %arg1[%c0_6, %c0_7, %c1] : memref<1x4x324xbf16, #tpu.memory_space<vmem>>, vector<1x4x286xbf16>
    %8 = vector.shape_cast %7 : vector<1x4x286xbf16> to vector<4x286xbf16>
    %c1_8 = arith.constant 1 : index
    %c0_9 = arith.constant 0 : index
    %c0_10 = arith.constant 0 : index
    %9 = vector.load %arg2[%c1_8, %c0_9, %c0_10] : memref<9x8x4xbf16, #tpu.memory_space<vmem>>, vector<1x8x4xbf16>
    %10 = vector.shape_cast %9 : vector<1x8x4xbf16> to vector<8x4xbf16>
    %cst_11 = arith.constant dense<0.000000e+00> : vector<8x286xf32>
    %11 = tpu.matmul %10, %8, %cst_11 {dimension_numbers = #tpu.dot_dimension_numbers<[1], [0], [0], [1], [0, 0, 1, 1], [], []>} : vector<8x4xbf16>, vector<4x286xbf16>, vector<8x286xf32> -> vector<8x286xf32>
    %12 = arith.addf %6, %11 : vector<8x286xf32>
    %c0_12 = arith.constant 0 : index
    %c0_13 = arith.constant 0 : index
    %c2 = arith.constant 2 : index
    %13 = vector.load %arg1[%c0_12, %c0_13, %c2] : memref<1x4x324xbf16, #tpu.memory_space<vmem>>, vector<1x4x286xbf16>
    %14 = vector.shape_cast %13 : vector<1x4x286xbf16> to vector<4x286xbf16>
    %c2_14 = arith.constant 2 : index
    %c0_15 = arith.constant 0 : index
    %c0_16 = arith.constant 0 : index
    %15 = vector.load %arg2[%c2_14, %c0_15, %c0_16] : memref<9x8x4xbf16, #tpu.memory_space<vmem>>, vector<1x8x4xbf16>
    %16 = vector.shape_cast %15 : vector<1x8x4xbf16> to vector<8x4xbf16>
    %cst_17 = arith.constant dense<0.000000e+00> : vector<8x286xf32>
    %17 = tpu.matmul %16, %14, %cst_17 {dimension_numbers = #tpu.dot_dimension_numbers<[1], [0], [0], [1], [0, 0, 1, 1], [], []>} : vector<8x4xbf16>, vector<4x286xbf16>, vector<8x286xf32> -> vector<8x286xf32>
    %18 = arith.addf %12, %17 : vector<8x286xf32>
    %c0_18 = arith.constant 0 : index
    %c0_19 = arith.constant 0 : index
    %c18 = arith.constant 18 : index
    %19 = vector.load %arg1[%c0_18, %c0_19, %c18] : memref<1x4x324xbf16, #tpu.memory_space<vmem>>, vector<1x4x286xbf16>
    %20 = vector.shape_cast %19 : vector<1x4x286xbf16> to vector<4x286xbf16>
    %c3 = arith.constant 3 : index
    %c0_20 = arith.constant 0 : index
    %c0_21 = arith.constant 0 : index
    %21 = vector.load %arg2[%c3, %c0_20, %c0_21] : memref<9x8x4xbf16, #tpu.memory_space<vmem>>, vector<1x8x4xbf16>
    %22 = vector.shape_cast %21 : vector<1x8x4xbf16> to vector<8x4xbf16>
    %cst_22 = arith.constant dense<0.000000e+00> : vector<8x286xf32>
    %23 = tpu.matmul %22, %20, %cst_22 {dimension_numbers = #tpu.dot_dimension_numbers<[1], [0], [0], [1], [0, 0, 1, 1], [], []>} : vector<8x4xbf16>, vector<4x286xbf16>, vector<8x286xf32> -> vector<8x286xf32>
    %24 = arith.addf %18, %23 : vector<8x286xf32>
    %c0_23 = arith.constant 0 : index
    %c0_24 = arith.constant 0 : index
    %c19 = arith.constant 19 : index
    %25 = vector.load %arg1[%c0_23, %c0_24, %c19] : memref<1x4x324xbf16, #tpu.memory_space<vmem>>, vector<1x4x286xbf16>
    %26 = vector.shape_cast %25 : vector<1x4x286xbf16> to vector<4x286xbf16>
    %c4 = arith.constant 4 : index
    %c0_25 = arith.constant 0 : index
    %c0_26 = arith.constant 0 : index
    %27 = vector.load %arg2[%c4, %c0_25, %c0_26] : memref<9x8x4xbf16, #tpu.memory_space<vmem>>, vector<1x8x4xbf16>
    %28 = vector.shape_cast %27 : vector<1x8x4xbf16> to vector<8x4xbf16>
    %cst_27 = arith.constant dense<0.000000e+00> : vector<8x286xf32>
    %29 = tpu.matmul %28, %26, %cst_27 {dimension_numbers = #tpu.dot_dimension_numbers<[1], [0], [0], [1], [0, 0, 1, 1], [], []>} : vector<8x4xbf16>, vector<4x286xbf16>, vector<8x286xf32> -> vector<8x286xf32>
    %30 = arith.addf %24, %29 : vector<8x286xf32>
    %c0_28 = arith.constant 0 : index
    %c0_29 = arith.constant 0 : index
    %c20 = arith.constant 20 : index
    %31 = vector.load %arg1[%c0_28, %c0_29, %c20] : memref<1x4x324xbf16, #tpu.memory_space<vmem>>, vector<1x4x286xbf16>
    %32 = vector.shape_cast %31 : vector<1x4x286xbf16> to vector<4x286xbf16>
    %c5 = arith.constant 5 : index
    %c0_30 = arith.constant 0 : index
    %c0_31 = arith.constant 0 : index
    %33 = vector.load %arg2[%c5, %c0_30, %c0_31] : memref<9x8x4xbf16, #tpu.memory_space<vmem>>, vector<1x8x4xbf16>
    %34 = vector.shape_cast %33 : vector<1x8x4xbf16> to vector<8x4xbf16>
    %cst_32 = arith.constant dense<0.000000e+00> : vector<8x286xf32>
    %35 = tpu.matmul %34, %32, %cst_32 {dimension_numbers = #tpu.dot_dimension_numbers<[1], [0], [0], [1], [0, 0, 1, 1], [], []>} : vector<8x4xbf16>, vector<4x286xbf16>, vector<8x286xf32> -> vector<8x286xf32>
    %36 = arith.addf %30, %35 : vector<8x286xf32>
    %c0_33 = arith.constant 0 : index
    %c0_34 = arith.constant 0 : index
    %c36 = arith.constant 36 : index
    %37 = vector.load %arg1[%c0_33, %c0_34, %c36] : memref<1x4x324xbf16, #tpu.memory_space<vmem>>, vector<1x4x286xbf16>
    %38 = vector.shape_cast %37 : vector<1x4x286xbf16> to vector<4x286xbf16>
    %c6 = arith.constant 6 : index
    %c0_35 = arith.constant 0 : index
    %c0_36 = arith.constant 0 : index
    %39 = vector.load %arg2[%c6, %c0_35, %c0_36] : memref<9x8x4xbf16, #tpu.memory_space<vmem>>, vector<1x8x4xbf16>
    %40 = vector.shape_cast %39 : vector<1x8x4xbf16> to vector<8x4xbf16>
    %cst_37 = arith.constant dense<0.000000e+00> : vector<8x286xf32>
    %41 = tpu.matmul %40, %38, %cst_37 {dimension_numbers = #tpu.dot_dimension_numbers<[1], [0], [0], [1], [0, 0, 1, 1], [], []>} : vector<8x4xbf16>, vector<4x286xbf16>, vector<8x286xf32> -> vector<8x286xf32>
    %42 = arith.addf %36, %41 : vector<8x286xf32>
    %c0_38 = arith.constant 0 : index
    %c0_39 = arith.constant 0 : index
    %c37 = arith.constant 37 : index
    %43 = vector.load %arg1[%c0_38, %c0_39, %c37] : memref<1x4x324xbf16, #tpu.memory_space<vmem>>, vector<1x4x286xbf16>
    %44 = vector.shape_cast %43 : vector<1x4x286xbf16> to vector<4x286xbf16>
    %c7 = arith.constant 7 : index
    %c0_40 = arith.constant 0 : index
    %c0_41 = arith.constant 0 : index
    %45 = vector.load %arg2[%c7, %c0_40, %c0_41] : memref<9x8x4xbf16, #tpu.memory_space<vmem>>, vector<1x8x4xbf16>
    %46 = vector.shape_cast %45 : vector<1x8x4xbf16> to vector<8x4xbf16>
    %cst_42 = arith.constant dense<0.000000e+00> : vector<8x286xf32>
    %47 = tpu.matmul %46, %44, %cst_42 {dimension_numbers = #tpu.dot_dimension_numbers<[1], [0], [0], [1], [0, 0, 1, 1], [], []>} : vector<8x4xbf16>, vector<4x286xbf16>, vector<8x286xf32> -> vector<8x286xf32>
    %48 = arith.addf %42, %47 : vector<8x286xf32>
    %c0_43 = arith.constant 0 : index
    %c0_44 = arith.constant 0 : index
    %c38 = arith.constant 38 : index
    %49 = vector.load %arg1[%c0_43, %c0_44, %c38] : memref<1x4x324xbf16, #tpu.memory_space<vmem>>, vector<1x4x286xbf16>
    %50 = vector.shape_cast %49 : vector<1x4x286xbf16> to vector<4x286xbf16>
    %c8 = arith.constant 8 : index
    %c0_45 = arith.constant 0 : index
    %c0_46 = arith.constant 0 : index
    %51 = vector.load %arg2[%c8, %c0_45, %c0_46] : memref<9x8x4xbf16, #tpu.memory_space<vmem>>, vector<1x8x4xbf16>
    %52 = vector.shape_cast %51 : vector<1x8x4xbf16> to vector<8x4xbf16>
    %cst_47 = arith.constant dense<0.000000e+00> : vector<8x286xf32>
    %53 = tpu.matmul %52, %50, %cst_47 {dimension_numbers = #tpu.dot_dimension_numbers<[1], [0], [0], [1], [0, 0, 1, 1], [], []>} : vector<8x4xbf16>, vector<4x286xbf16>, vector<8x286xf32> -> vector<8x286xf32>
    %54 = arith.addf %48, %53 : vector<8x286xf32>
    %c0_48 = arith.constant 0 : index
    %c0_49 = arith.constant 0 : index
    %55 = vector.load %arg3[%c0_48, %c0_49] : memref<8x1xf32, #tpu.memory_space<vmem>>, vector<8x1xf32>
    %56 = vector.broadcast %55 : vector<8x1xf32> to vector<8x286xf32>
    %57 = arith.mulf %54, %56 : vector<8x286xf32>
    %c0_50 = arith.constant 0 : index
    %c0_51 = arith.constant 0 : index
    %58 = vector.load %arg4[%c0_50, %c0_51] : memref<8x1xf32, #tpu.memory_space<vmem>>, vector<8x1xf32>
    %59 = vector.broadcast %58 : vector<8x1xf32> to vector<8x286xf32>
    %60 = arith.addf %57, %59 : vector<8x286xf32>
    %cst_52 = arith.constant 0.000000e+00 : f32
    %61 = vector.broadcast %cst_52 : f32 to vector<8x286xf32>
    %62 = arith.cmpf oge, %60, %61 : vector<8x286xf32>
    %cst_53 = arith.constant 1.000000e-01 : f32
    %63 = vector.broadcast %cst_53 : f32 to vector<8x286xf32>
    %64 = arith.mulf %63, %60 : vector<8x286xf32>
    %65 = arith.select %62, %60, %64 : vector<8x286xi1>, vector<8x286xf32>
    %c0_54 = arith.constant 0 : index
    %c0_55 = arith.constant 0 : index
    %c0_56 = arith.constant 0 : index
    %66 = vector.load %arg5[%c0_54, %c0_55, %c0_56] : memref<1x8x286xf32, #tpu.memory_space<vmem>>, vector<1x8x286xf32>
    %67 = vector.shape_cast %66 : vector<1x8x286xf32> to vector<8x286xf32>
    %68 = vector.shape_cast %65 : vector<8x286xf32> to vector<1x8x286xf32>
    tpu.vector_store %arg5[%c0_54, %c0_55, %c0_56], %68 {strides = array<i32>} : memref<1x8x286xf32, #tpu.memory_space<vmem>>, vector<1x8x286xf32>,
    return
  }
  func.func @transform_0(%arg0: i32) -> (i32, i32, i32) {
    %c0_i32 = arith.constant 0 : i32
    %c0_i32_0 = arith.constant 0 : i32
    %c0_i32_1 = arith.constant 0 : i32
    return %arg0, %c0_i32, %c0_i32_0 : i32, i32, i32
  }
  func.func @transform_1(%arg0: i32) -> (i32, i32, i32) {
    %c0_i32 = arith.constant 0 : i32
    %c0_i32_0 = arith.constant 0 : i32
    %c0_i32_1 = arith.constant 0 : i32
    %c0_i32_2 = arith.constant 0 : i32
    return %c0_i32, %c0_i32_0, %c0_i32_1 : i32, i32, i32
  }
  func.func @transform_2(%arg0: i32) -> (i32, i32) {
    %c0_i32 = arith.constant 0 : i32
    %c0_i32_0 = arith.constant 0 : i32
    %c0_i32_1 = arith.constant 0 : i32
    return %c0_i32, %c0_i32_0 : i32, i32
  }
  func.func @transform_3(%arg0: i32) -> (i32, i32) {
    %c0_i32 = arith.constant 0 : i32
    %c0_i32_0 = arith.constant 0 : i32
    %c0_i32_1 = arith.constant 0 : i32
    return %c0_i32, %c0_i32_0 : i32, i32
  }
  func.func @transform_4(%arg0: i32) -> (i32, i32, i32) {
    %c0_i32 = arith.constant 0 : i32
    %c0_i32_0 = arith.constant 0 : i32
    %c0_i32_1 = arith.constant 0 : i32
    return %arg0, %c0_i32, %c0_i32_0 : i32, i32, i32
  }
}

</mosaic_0001>

<llo_original>
// kernel: conv_block_forward.1
$region0: #{conv_block_forward.1}
  #allocation0 [shape = 'u32[]', space=smem, size = 0x4, offset = 0x4, fixed_abs, tag = 'smem constant byte address 0x4 - core index']
  #allocation1 [shape = 'u32[144,128]{1,0:T(1,128)}', space=vmem, size = 0x12000, scoped, tag = 'internal scratch']
  %s0 = inlined_call_operand.vmem [shape: bf16[2,4,324], index: 0, kind: input, shape index: {}]
  %s1 = inlined_call_operand.vmem [shape: bf16[9,8,4], index: 1, kind: input, shape index: {}]
  %s2 = inlined_call_operand.vmem [shape: f32[8,1], index: 2, kind: input, shape index: {}]
  %s3 = inlined_call_operand.vmem [shape: f32[8,1], index: 3, kind: input, shape index: {}]
  %s4 = inlined_call_operand.vmem [shape: f32[2,8,286], index: 4, kind: output, shape index: {}]
  %s5 = sld [smem:[#allocation0]]
  $region49: #{conv_block_forward.1} parent=0
    _
  %s7 = ssub.s32 1, %s5
  %s8 = scalar_select 0, %s7, %s5
  loop: start=0, step=1, limit=4
  $region2: #{conv_block_forward.1} parent=0 // loop_pre_header
    _
  $region3: #{conv_block_forward.1} parent=0 // loop_header
    %s10 = sphi 0, %s14
    %p11 = scmp.ge.s32.totalorder %s10, 4
    %s20 = sphi 0, %s22
    %s23 = sphi 0, %s20
    %s24 = sphi 0, %s23
    %s40 = sphi 0, %s24
    %s44 = sphi 0, %s44
    %s46 = sphi 0, %s44
    %s47 = sphi 0, %s46
    %s61 = sphi 0, %s47
    %s65 = sphi 0, %s65
    %s67 = sphi 0, %s65
    %s68 = sphi 0, %s67
    %s82 = sphi 0, %s68
    %s86 = sphi 0, %s86
    %s88 = sphi 0, %s86
    %s89 = sphi 0, %s88
    %s103 = sphi 0, %s89
    %s109 = sphi 0, %s111
    %s112 = sphi 0, %s109
    %s113 = sphi 0, %s112
    %s129 = sphi 0, %s113
  $region4: #{conv_block_forward.1} parent=0 // loop_header_branch
    %13 = sbr.rel (%p11) target = $region8
  $region5: #{conv_block_forward.1} parent=0 // loop_body
    %s15 = ssub.s32 %s10, 1
    %s16 = ssub.s32 %s10, 2
    %s17 = sadd.s32 %s10, 1
    %s18 = ssub.s32 %s10, %s17
    %p19 = scmp.eq.s32.totalorder %s18, 0
    %s21 = sadd.s32 %s20, 1
    %s22 = scalar_select %p19, %s20, %s21
    %p25 = pneg %p19
    %p26 = scmp.eq.s32.totalorder %s10, 1
    %p27 = por %p25, %p26
    %p28 = scmp.ne.s32.totalorder %s20, %s23
    %p29 = scmp.eq.s32.totalorder %s10, 0
    %p30 = por %p28, %p29
    %p31 = scmp.ne.s32.totalorder %s20, %s23
    %p32 = scmp.eq.s32.totalorder %s15, 1
    %p33 = por %p31, %p32
    %p34 = scmp.ne.s32.totalorder %s23, %s24
    %p35 = scmp.eq.s32.totalorder %s15, 0
    %p36 = por %p34, %p35
    %p37 = scmp.ne.s32.totalorder %s23, %s24
    %p38 = scmp.eq.s32.totalorder %s16, 1
    %p39 = por %p37, %p38
    %p41 = scmp.ne.s32.totalorder %s24, %s40
    %p42 = scmp.eq.s32.totalorder %s16, 0
    %p43 = por %p41, %p42
    %s45 = sadd.s32 %s44, 1
    %p48 = scmp.eq.s32.totalorder %s10, 1
    %p49 = scmp.ne.s32.totalorder %s44, %s46
    %p50 = scmp.eq.s32.totalorder %s10, 0
    %p51 = por %p49, %p50
    %p52 = scmp.ne.s32.totalorder %s44, %s46
    %p53 = scmp.eq.s32.totalorder %s15, 1
    %p54 = por %p52, %p53
    %p55 = scmp.ne.s32.totalorder %s46, %s47
    %p56 = scmp.eq.s32.totalorder %s15, 0
    %p57 = por %p55, %p56
    %p58 = scmp.ne.s32.totalorder %s46, %s47
    %p59 = scmp.eq.s32.totalorder %s16, 1
    %p60 = por %p58, %p59
    %p62 = scmp.ne.s32.totalorder %s47, %s61
    %p63 = scmp.eq.s32.totalorder %s16, 0
    %p64 = por %p62, %p63
    %s66 = sadd.s32 %s65, 1
    %p69 = scmp.eq.s32.totalorder %s10, 1
    %p70 = scmp.ne.s32.totalorder %s65, %s67
    %p71 = scmp.eq.s32.totalorder %s10, 0
    %p72 = por %p70, %p71
    %p73 = scmp.ne.s32.totalorder %s65, %s67
    %p74 = scmp.eq.s32.totalorder %s15, 1
    %p75 = por %p73, %p74
    %p76 = scmp.ne.s32.totalorder %s67, %s68
    %p77 = scmp.eq.s32.totalorder %s15, 0
    %p78 = por %p76, %p77
    %p79 = scmp.ne.s32.totalorder %s67, %s68
    %p80 = scmp.eq.s32.totalorder %s16, 1
    %p81 = por %p79, %p80
    %p83 = scmp.ne.s32.totalorder %s68, %s82
    %p84 = scmp.eq.s32.totalorder %s16, 0
    %p85 = por %p83, %p84
    %s87 = sadd.s32 %s86, 1
    %p90 = scmp.eq.s32.totalorder %s10, 1
    %p91 = scmp.ne.s32.totalorder %s86, %s88
    %p92 = scmp.eq.s32.totalorder %s10, 0
    %p93 = por %p91, %p92
    %p94 = scmp.ne.s32.totalorder %s86, %s88
    %p95 = scmp.eq.s32.totalorder %s15, 1
    %p96 = por %p94, %p95
    %p97 = scmp.ne.s32.totalorder %s88, %s89
    %p98 = scmp.eq.s32.totalorder %s15, 0
    %p99 = por %p97, %p98
    %p100 = scmp.ne.s32.totalorder %s88, %s89
    %p101 = scmp.eq.s32.totalorder %s16, 1
    %p102 = por %p100, %p101
    %p104 = scmp.ne.s32.totalorder %s89, %s103
    %p105 = scmp.eq.s32.totalorder %s16, 0
    %p106 = por %p104, %p105
    %s107 = ssub.s32 %s10, %s17
    %p108 = scmp.eq.s32.totalorder %s107, 0
    %s110 = sadd.s32 %s109, 1
    %s111 = scalar_select %p108, %s109, %s110
    %p114 = pneg %p108
    %p115 = scmp.eq.s32.totalorder %s10, 1
    %p116 = por %p114, %p115
    %p117 = scmp.ne.s32.totalorder %s109, %s112
    %p118 = scmp.eq.s32.totalorder %s10, 0
    %p119 = por %p117, %p118
    %p120 = scmp.ne.s32.totalorder %s109, %s112
    %p121 = scmp.eq.s32.totalorder %s15, 1
    %p122 = por %p120, %p121
    %p123 = scmp.ne.s32.totalorder %s112, %s113
    %p124 = scmp.eq.s32.totalorder %s15, 0
    %p125 = por %p123, %p124
    %p126 = scmp.ne.s32.totalorder %s112, %s113
    %p127 = scmp.eq.s32.totalorder %s16, 1
    %p128 = por %p126, %p127
    %p130 = scmp.ne.s32.totalorder %s113, %s129
    %p131 = scmp.eq.s32.totalorder %s16, 0
    %p132 = por %p130, %p131
    %p133 = scmp.le.s32.totalorder 1, %s10
    %p134 = scmp.lt.s32.totalorder %s10, 3
    %p135 = pnand %p133, %p134
    %p136 = pneg %p135
    // Predicated region
    $region9: #{conv_block_forward.1} parent=5 // pred_check
      _
    $region10: #{conv_block_forward.1} parent=5 // pred_check_branch
      %138 = sbr.rel (%p135) target = $region12
    $region11: #{conv_block_forward.1} parent=5 // pred_region
      %s139 = ssub.s32 %s10, 1
      // Predicated region
      $region13: #{conv_block_forward.1} parent=11 // pred_check
        %p140 = pneg %p57
      $region14: #{conv_block_forward.1} parent=11 // pred_check_branch
        %142 = sbr.rel (%p140) target = $region16
      $region15: #{conv_block_forward.1} parent=11 // pred_region
        _
      $region16: #{conv_block_forward.1} parent=11 // pred_fallthru
        _
      // Predicated region
      $region17: #{conv_block_forward.1} parent=11 // pred_check
        %p143 = pneg %p78
      $region18: #{conv_block_forward.1} parent=11 // pred_check_branch
        %145 = sbr.rel (%p143) target = $region20
      $region19: #{conv_block_forward.1} parent=11 // pred_region
        _
      $region20: #{conv_block_forward.1} parent=11 // pred_fallthru
        _
      // Predicated region
      $region21: #{conv_block_forward.1} parent=11 // pred_check
        %p146 = pneg %p99
      $region22: #{conv_block_forward.1} parent=11 // pred_check_branch
        %148 = sbr.rel (%p146) target = $region24
      $region23: #{conv_block_forward.1} parent=11 // pred_region
        _
      $region24: #{conv_block_forward.1} parent=11 // pred_fallthru
        _
    $region12: #{conv_block_forward.1} parent=5 // pred_fallthru
      _
    %p149 = scmp.lt.s32.totalorder %s10, 2
    // Predicated region
    $region25: #{conv_block_forward.1} parent=5 // pred_check
      %p150 = pneg %p149
    $region26: #{conv_block_forward.1} parent=5 // pred_check_branch
      %152 = sbr.rel (%p150) target = $region28
    $region27: #{conv_block_forward.1} parent=5 // pred_region
      // Predicated region
      $region29: #{conv_block_forward.1} parent=27 // pred_check
        %p153 = pneg %p30
      $region30: #{conv_block_forward.1} parent=27 // pred_check_branch
        %155 = sbr.rel (%p153) target = $region32
      $region31: #{conv_block_forward.1} parent=27 // pred_region
        %p156 = scmp.lt.s32.totalorder %s10, 1
        %s157 = scalar_select %p156, %s10, 1
        %s158 = smul.addr %s157, 3
        %s159 = smul.addr %s158, 2
        %s160 = scalar_lea.vmem %s0, %s159
      $region32: #{conv_block_forward.1} parent=27 // pred_fallthru
        _
    $region28: #{conv_block_forward.1} parent=5 // pred_fallthru
      _
    %p161 = scmp.le.s32.totalorder 1, %s10
    %p162 = scmp.lt.s32.totalorder %s10, 3
    %p163 = pnand %p161, %p162
    %p164 = pneg %p163
    // Predicated region
    $region33: #{conv_block_forward.1} parent=5 // pred_check
      _
    $region34: #{conv_block_forward.1} parent=5 // pred_check_branch
      %166 = sbr.rel (%p163) target = $region36
    $region35: #{conv_block_forward.1} parent=5 // pred_region
      %s167 = ssub.s32 %s10, 1
      %p168 = scmp.lt.s32.totalorder %s15, 1
      %s169 = scalar_select %p168, %s15, 1
      %s170 = smul.addr %s169, 3
      %s171 = smul.addr %s170, 2
      %s172 = scalar_lea.vmem %s0, %s171
      %p173 = pneg %p36
      %p174 = pneg %p33
      %p175 = pneg %p57
      %p176 = pneg %p54
      %p177 = pneg %p78
      %p178 = pneg %p75
      %p179 = pneg %p99
      %p180 = pneg %p96
      %p181 = pneg %p125
      %p182 = pneg %p122
      %p183 = scmp.lt.s32.totalorder %s15, 1
      %s184 = scalar_select %p183, %s15, 1
      %s185 = smul.addr %s184, 3
      %s186 = smul.addr %s185, 8
      %s187 = scalar_lea.vmem %s4, %s186
      %p188 = scmp.lt.s32.totalorder %s15, 1
      %s189 = scalar_select %p188, %s15, 1
      %s190 = smul.addr %s189, 3
      %s191 = smul.addr %s190, 2
      %s192 = scalar_lea.vmem %s0, %s191
      %p193 = scmp.lt.s32.totalorder %s15, 1
      %s194 = scalar_select %p193, %s15, 1
      %s195 = smul.addr %s194, 3
      %s196 = smul.addr %s195, 8
      %s197 = scalar_lea.vmem %s4, %s196
      %v199 = vld [vmem:[%s192] sm:$0x3f]
      %v200 = vld [vmem:[%s1] sm:$0xf]
      %s201 = scalar_lea.vmem %s1, 4
      %v202 = vld [vmem:[%s201] sm:$0xf]
      %v204 = vcombine.high %v199, %v199
      %v206 = vunpack.c.l.s4 1983009808
      %v207 = vunpack.c.0.s8 %v206
      %v208 = vlaneseq
      %v209 = vshrl.u32 %v208, 7
      %v210 = vsub.s32 %v207, %v209
      %v211 = vrot.slane %v199, %v210
      %v213 = vunpack.c.l.s4 1983009808
      %v214 = vunpack.c.0.s8 %v213
      %v215 = vlaneseq
      %v216 = vshrl.u32 %v215, 7
      %v217 = vsub.s32 %v214, %v216
      %v218 = vrot.slane %v204, %v217
      %v219 = vcombine.high %v211, %v211
      %220 = vrot.lane.b32.xlu0 %v211, 127
      %v221 = vpop.permute.xlu0 %220
      %222 = vrot.lane.b32.xlu0 %v219, 127
      %v223 = vpop.permute.xlu0 %222
      %224 = vrot.lane.b32.xlu0 %v218, 127
      %v225 = vpop.permute.xlu0 %224
      %vm226 = vcmask 1039360
      %v227 = vsel %vm226, %v221, %v223
      %v228 = vsel %vm226, %v223, %v225
      %vm229 = vcmask 31744
      %v231 = vsel %vm229, %v202, 0
      %vm233 = vcmask 1041408
      %v235 = vsel %vm233, %v227, 0
      %v238 = vsel %vm233, %v228, 0
      %v241 = vsel %vm233, %v225, 0
      %243 = vmatprep.subr.bf16.mxu0 0
      %244 = vmatpush1.bf16.msra.mxu0 0
      %245 = vmatprep.subr.bf16.mxu0 0
      %246 = vmatpush1.bf16.msra.mxu0 0
      %247 = vmatprep.subr.bf16.mxu0 0
      %248 = vmatpush1.bf16.msra.mxu0 0
      %249 = vmatprep.subr.bf16.mxu0 0
      %250 = vmatpush1.bf16.msra.mxu0 0
      %251 = vmatprep.subr.bf16.mxu0 0
      %252 = vmatpush1.bf16.msra.mxu0 0
      %253 = vmatprep.subr.bf16.mxu0 0
      %254 = vmatpush1.bf16.msra.mxu0 0
      %255 = vmatprep.subr.bf16.mxu0 0
      %256 = vmatpush1.bf16.msra.mxu0 0
      %257 = vmatprep.subr.bf16.mxu0 %v238
      %258 = vmatpush1.bf16.msra.mxu0 %v235
      %259 = vmatprep.subr.bf16.mxu0 0
      %260 = vmatpush2.bf16.msra.mxu0 0
      %261 = vmatprep.subr.bf16.mxu0 0
      %262 = vmatpush2.bf16.msra.mxu0 0
      %263 = vmatprep.subr.bf16.mxu0 0
      %264 = vmatpush2.bf16.msra.mxu0 0
      %265 = vmatprep.subr.bf16.mxu0 0
      %266 = vmatpush2.bf16.msra.mxu0 0
      %267 = vmatprep.subr.bf16.mxu0 0
      %268 = vmatpush2.bf16.msra.mxu0 0
      %269 = vmatprep.subr.bf16.mxu0 0
      %270 = vmatpush2.bf16.msra.mxu0 0
      %271 = vmatprep.subr.bf16.mxu0 0
      %272 = vmatpush2.bf16.msra.mxu0 0
      %273 = vmatprep.subr.bf16.mxu0 0
      %274 = vmatpush2.bf16.msra.mxu0 0
      %275 = vmatprep.mubr.bf16.mxu0 0
      %276 = vmatmul.mubr.bf16.gmra.mxu0 %v231
      %v277 = vpop.f32.mrf.mxu0
      %v278 = vadd.f32 0.0, %v277
      %v279 = vpop.f32.mrf.mxu0
      %v280 = vadd.f32 0.0, %v279
      %v281 = vpop.f32.mrf.mxu0
      %v282 = vpop.f32.mrf.mxu0
      %283 = vdwg.mxu0
      %284 = vmatprep.subr.bf16.mxu0 0
      %285 = vmatpush1.bf16.msra.mxu0 0
      %286 = vmatprep.subr.bf16.mxu0 0
      %287 = vmatpush1.bf16.msra.mxu0 0
      %288 = vmatprep.subr.bf16.mxu0 0
      %289 = vmatpush1.bf16.msra.mxu0 0
      %290 = vmatprep.subr.bf16.mxu0 0
      %291 = vmatpush1.bf16.msra.mxu0 0
      %292 = vmatprep.subr.bf16.mxu0 0
      %293 = vmatpush1.bf16.msra.mxu0 0
      %294 = vmatprep.subr.bf16.mxu0 0
      %295 = vmatpush1.bf16.msra.mxu0 0
      %296 = vmatprep.subr.bf16.mxu0 0
      %297 = vmatpush1.bf16.msra.mxu0 0
      %298 = vmatprep.subr.bf16.mxu0 0
      %299 = vmatpush1.bf16.msra.mxu0 %v241
      %300 = vmatprep.subr.bf16.mxu0 0
      %301 = vmatpush2.bf16.msra.mxu0 0
      %302 = vmatprep.subr.bf16.mxu0 0
      %303 = vmatpush2.bf16.msra.mxu0 0
      %304 = vmatprep.subr.bf16.mxu0 0
      %305 = vmatpush2.bf16.msra.mxu0 0
      %306 = vmatprep.subr.bf16.mxu0 0
      %307 = vmatpush2.bf16.msra.mxu0 0
      %308 = vmatprep.subr.bf16.mxu0 0
      %309 = vmatpush2.bf16.msra.mxu0 0
      %310 = vmatprep.subr.bf16.mxu0 0
      %311 = vmatpush2.bf16.msra.mxu0 0
      %312 = vmatprep.subr.bf16.mxu0 0
      %313 = vmatpush2.bf16.msra.mxu0 0
      %314 = vmatprep.subr.bf16.mxu0 0
      %315 = vmatpush2.bf16.msra.mxu0 0
      %316 = vmatprep.mubr.bf16.mxu0 0
      %317 = vmatmul.mubr.bf16.gmra.mxu0 %v231
      %v318 = vpop.f32.mrf.mxu0
      %v319 = vadd.f32 0.0, %v318
      %v320 = vpop.f32.mrf.mxu0
      %v321 = vpop.f32.mrf.mxu0
      %v322 = vpop.f32.mrf.mxu0
      %323 = vdwg.mxu0
      %v325 = vsel %vm229, %v200, 0
      %v328 = vsel %vm233, %v211, 0
      %v331 = vsel %vm233, %v219, 0
      %v334 = vsel %vm233, %v218, 0
      %336 = vmatprep.subr.bf16.mxu0 0
      %337 = vmatpush1.bf16.msra.mxu0 0
      %338 = vmatprep.subr.bf16.mxu0 0
      %339 = vmatpush1.bf16.msra.mxu0 0
      %340 = vmatprep.subr.bf16.mxu0 0
      %341 = vmatpush1.bf16.msra.mxu0 0
      %342 = vmatprep.subr.bf16.mxu0 0
      %343 = vmatpush1.bf16.msra.mxu0 0
      %344 = vmatprep.subr.bf16.mxu0 0
      %345 = vmatpush1.bf16.msra.mxu0 0
      %346 = vmatprep.subr.bf16.mxu0 0
      %347 = vmatpush1.bf16.msra.mxu0 0
      %348 = vmatprep.subr.bf16.mxu0 0
      %349 = vmatpush1.bf16.msra.mxu0 0
      %350 = vmatprep.subr.bf16.mxu0 %v331
      %351 = vmatpush1.bf16.msra.mxu0 %v328
      %352 = vmatprep.subr.bf16.mxu0 0
      %353 = vmatpush2.bf16.msra.mxu0 0
      %354 = vmatprep.subr.bf16.mxu0 0
      %355 = vmatpush2.bf16.msra.mxu0 0
      %356 = vmatprep.subr.bf16.mxu0 0
      %357 = vmatpush2.bf16.msra.mxu0 0
      %358 = vmatprep.subr.bf16.mxu0 0
      %359 = vmatpush2.bf16.msra.mxu0 0
      %360 = vmatprep.subr.bf16.mxu0 0
      %361 = vmatpush2.bf16.msra.mxu0 0
      %362 = vmatprep.subr.bf16.mxu0 0
      %363 = vmatpush2.bf16.msra.mxu0 0
      %364 = vmatprep.subr.bf16.mxu0 0
      %365 = vmatpush2.bf16.msra.mxu0 0
      %366 = vmatprep.subr.bf16.mxu0 0
      %367 = vmatpush2.bf16.msra.mxu0 0
      %368 = vmatprep.mubr.bf16.mxu0 0
      %369 = vmatmul.mubr.bf16.gmra.mxu0 %v325
      %v370 = vpop.f32.mrf.mxu0
      %v371 = vadd.f32 %v278, %v370
      %v372 = vpop.f32.mrf.mxu0
      %v373 = vadd.f32 %v280, %v372
      %v374 = vpop.f32.mrf.mxu0
      %v375 = vpop.f32.mrf.mxu0
      %376 = vdwg.mxu0
      %377 = vmatprep.subr.bf16.mxu0 0
      %378 = vmatpush1.bf16.msra.mxu0 0
      %379 = vmatprep.subr.bf16.mxu0 0
      %380 = vmatpush1.bf16.msra.mxu0 0
      %381 = vmatprep.subr.bf16.mxu0 0
      %382 = vmatpush1.bf16.msra.mxu0 0
      %383 = vmatprep.subr.bf16.mxu0 0
      %384 = vmatpush1.bf16.msra.mxu0 0
      %385 = vmatprep.subr.bf16.mxu0 0
      %386 = vmatpush1.bf16.msra.mxu0 0
      %387 = vmatprep.subr.bf16.mxu0 0
      %388 = vmatpush1.bf16.msra.mxu0 0
      %389 = vmatprep.subr.bf16.mxu0 0
      %390 = vmatpush1.bf16.msra.mxu0 0
      %391 = vmatprep.subr.bf16.mxu0 0
      %392 = vmatpush1.bf16.msra.mxu0 %v334
      %393 = vmatprep.subr.bf16.mxu0 0
      %394 = vmatpush2.bf16.msra.mxu0 0
      %395 = vmatprep.subr.bf16.mxu0 0
      %396 = vmatpush2.bf16.msra.mxu0 0
      %397 = vmatprep.subr.bf16.mxu0 0
      %398 = vmatpush2.bf16.msra.mxu0 0
      %399 = vmatprep.subr.bf16.mxu0 0
      %400 = vmatpush2.bf16.msra.mxu0 0
      %401 = vmatprep.subr.bf16.mxu0 0
      %402 = vmatpush2.bf16.msra.mxu0 0
      %403 = vmatprep.subr.bf16.mxu0 0
      %404 = vmatpush2.bf16.msra.mxu0 0
      %405 = vmatprep.subr.bf16.mxu0 0
      %406 = vmatpush2.bf16.msra.mxu0 0
      %407 = vmatprep.subr.bf16.mxu0 0
      %408 = vmatpush2.bf16.msra.mxu0 0
      %409 = vmatprep.mubr.bf16.mxu0 0
      %410 = vmatmul.mubr.bf16.gmra.mxu0 %v325
      %v411 = vpop.f32.mrf.mxu0
      %v412 = vadd.f32 %v319, %v411
      %v413 = vpop.f32.mrf.mxu0
      %v414 = vpop.f32.mrf.mxu0
      %v415 = vpop.f32.mrf.mxu0
      %416 = vdwg.mxu0
      %v417 = vld [vmem:[%s192] sm:$0x3f]
      %s418 = scalar_lea.vmem %s1, 8
      %v419 = vld [vmem:[%s418] sm:$0xf]
      %v421 = vcombine.high %v417, %v417
      %v423 = vunpack.c.l.s4 1983009808
      %v424 = vunpack.c.0.s8 %v423
      %v425 = vlaneseq
      %v426 = vshrl.u32 %v425, 7
      %v427 = vsub.s32 %v424, %v426
      %v428 = vrot.slane %v417, %v427
      %v430 = vunpack.c.l.s4 1983009808
      %v431 = vunpack.c.0.s8 %v430
      %v432 = vlaneseq
      %v433 = vshrl.u32 %v432, 7
      %v434 = vsub.s32 %v431, %v433
      %v435 = vrot.slane %v421, %v434
      %v436 = vcombine.high %v428, %v428
      %437 = vrot.lane.b32.xlu0 %v428, 126
      %v438 = vpop.permute.xlu0 %437
      %439 = vrot.lane.b32.xlu0 %v436, 126
      %v440 = vpop.permute.xlu0 %439
      %441 = vrot.lane.b32.xlu0 %v435, 126
      %v442 = vpop.permute.xlu0 %441
      %vm443 = vcmask 1031168
      %v444 = vsel %vm443, %v438, %v440
      %v445 = vsel %vm443, %v440, %v442
      %v447 = vsel %vm229, %v419, 0
      %v450 = vsel %vm233, %v444, 0
      %v453 = vsel %vm233, %v445, 0
      %v456 = vsel %vm233, %v442, 0
      %458 = vmatprep.subr.bf16.mxu0 0
      %459 = vmatpush1.bf16.msra.mxu0 0
      %460 = vmatprep.subr.bf16.mxu0 0
      %461 = vmatpush1.bf16.msra.mxu0 0
      %462 = vmatprep.subr.bf16.mxu0 0
      %463 = vmatpush1.bf16.msra.mxu0 0
      %464 = vmatprep.subr.bf16.mxu0 0
      %465 = vmatpush1.bf16.msra.mxu0 0
      %466 = vmatprep.subr.bf16.mxu0 0
      %467 = vmatpush1.bf16.msra.mxu0 0
      %468 = vmatprep.subr.bf16.mxu0 0
      %469 = vmatpush1.bf16.msra.mxu0 0
      %470 = vmatprep.subr.bf16.mxu0 0
      %471 = vmatpush1.bf16.msra.mxu0 0
      %472 = vmatprep.subr.bf16.mxu0 %v453
      %473 = vmatpush1.bf16.msra.mxu0 %v450
      %474 = vmatprep.subr.bf16.mxu0 0
      %475 = vmatpush2.bf16.msra.mxu0 0
      %476 = vmatprep.subr.bf16.mxu0 0
      %477 = vmatpush2.bf16.msra.mxu0 0
      %478 = vmatprep.subr.bf16.mxu0 0
      %479 = vmatpush2.bf16.msra.mxu0 0
      %480 = vmatprep.subr.bf16.mxu0 0
      %481 = vmatpush2.bf16.msra.mxu0 0
      %482 = vmatprep.subr.bf16.mxu0 0
      %483 = vmatpush2.bf16.msra.mxu0 0
      %484 = vmatprep.subr.bf16.mxu0 0
      %485 = vmatpush2.bf16.msra.mxu0 0
      %486 = vmatprep.subr.bf16.mxu0 0
      %487 = vmatpush2.bf16.msra.mxu0 0
      %488 = vmatprep.subr.bf16.mxu0 0
      %489 = vmatpush2.bf16.msra.mxu0 0
      %490 = vmatprep.mubr.bf16.mxu0 0
      %491 = vmatmul.mubr.bf16.gmra.mxu0 %v447
      %v492 = vpop.f32.mrf.mxu0
      %v493 = vadd.f32 0.0, %v492
      %v494 = vpop.f32.mrf.mxu0
      %v495 = vadd.f32 0.0, %v494
      %v496 = vpop.f32.mrf.mxu0
      %v497 = vpop.f32.mrf.mxu0
      %498 = vdwg.mxu0
      %499 = vmatprep.subr.bf16.mxu0 0
      %500 = vmatpush1.bf16.msra.mxu0 0
      %501 = vmatprep.subr.bf16.mxu0 0
      %502 = vmatpush1.bf16.msra.mxu0 0
      %503 = vmatprep.subr.bf16.mxu0 0
      %504 = vmatpush1.bf16.msra.mxu0 0
      %505 = vmatprep.subr.bf16.mxu0 0
      %506 = vmatpush1.bf16.msra.mxu0 0
      %507 = vmatprep.subr.bf16.mxu0 0
      %508 = vmatpush1.bf16.msra.mxu0 0
      %509 = vmatprep.subr.bf16.mxu0 0
      %510 = vmatpush1.bf16.msra.mxu0 0
      %511 = vmatprep.subr.bf16.mxu0 0
      %512 = vmatpush1.bf16.msra.mxu0 0
      %513 = vmatprep.subr.bf16.mxu0 0
      %514 = vmatpush1.bf16.msra.mxu0 %v456
      %515 = vmatprep.subr.bf16.mxu0 0
      %516 = vmatpush2.bf16.msra.mxu0 0
      %517 = vmatprep.subr.bf16.mxu0 0
      %518 = vmatpush2.bf16.msra.mxu0 0
      %519 = vmatprep.subr.bf16.mxu0 0
      %520 = vmatpush2.bf16.msra.mxu0 0
      %521 = vmatprep.subr.bf16.mxu0 0
      %522 = vmatpush2.bf16.msra.mxu0 0
      %523 = vmatprep.subr.bf16.mxu0 0
      %524 = vmatpush2.bf16.msra.mxu0 0
      %525 = vmatprep.subr.bf16.mxu0 0
      %526 = vmatpush2.bf16.msra.mxu0 0
      %527 = vmatprep.subr.bf16.mxu0 0
      %528 = vmatpush2.bf16.msra.mxu0 0
      %529 = vmatprep.subr.bf16.mxu0 0
      %530 = vmatpush2.bf16.msra.mxu0 0
      %531 = vmatprep.mubr.bf16.mxu0 0
      %532 = vmatmul.mubr.bf16.gmra.mxu0 %v447
      %v533 = vpop.f32.mrf.mxu0
      %v534 = vadd.f32 0.0, %v533
      %v535 = vpop.f32.mrf.mxu0
      %v536 = vpop.f32.mrf.mxu0
      %v537 = vpop.f32.mrf.mxu0
      %538 = vdwg.mxu0
      %v539 = vadd.f32 %v371, %v493
      %v540 = vadd.f32 %v373, %v495
      %v541 = vadd.f32 %v412, %v534
      %v542 = vld [vmem:[%s192] sm:$0x3f]
      %s543 = scalar_lea.vmem %s1, 12
      %v544 = vld [vmem:[%s543] sm:$0xf]
      %v546 = vcombine.high %v542, %v542
      %v548 = vunpack.c.l.s4 1983009808
      %v549 = vunpack.c.0.s8 %v548
      %v550 = vlaneseq
      %v551 = vshrl.u32 %v550, 7
      %v552 = vsub.s32 %v549, %v551
      %v553 = vrot.slane %v542, %v552
      %v555 = vunpack.c.l.s4 1983009808
      %v556 = vunpack.c.0.s8 %v555
      %v557 = vlaneseq
      %v558 = vshrl.u32 %v557, 7
      %v559 = vsub.s32 %v556, %v558
      %v560 = vrot.slane %v546, %v559
      %v561 = vcombine.high %v553, %v553
      %562 = vrot.lane.b32.xlu0 %v553, 110
      %v563 = vpop.permute.xlu0 %562
      %564 = vrot.lane.b32.xlu0 %v561, 110
      %v565 = vpop.permute.xlu0 %564
      %566 = vrot.lane.b32.xlu0 %v560, 110
      %v567 = vpop.permute.xlu0 %566
      %vm568 = vcmask 900096
      %v569 = vsel %vm568, %v563, %v565
      %v570 = vsel %vm568, %v565, %v567
      %v572 = vsel %vm229, %v544, 0
      %v575 = vsel %vm233, %v569, 0
      %v578 = vsel %vm233, %v570, 0
      %v581 = vsel %vm233, %v567, 0
      %583 = vmatprep.subr.bf16.mxu0 0
      %584 = vmatpush1.bf16.msra.mxu0 0
      %585 = vmatprep.subr.bf16.mxu0 0
      %586 = vmatpush1.bf16.msra.mxu0 0
      %587 = vmatprep.subr.bf16.mxu0 0
      %588 = vmatpush1.bf16.msra.mxu0 0
      %589 = vmatprep.subr.bf16.mxu0 0
      %590 = vmatpush1.bf16.msra.mxu0 0
      %591 = vmatprep.subr.bf16.mxu0 0
      %592 = vmatpush1.bf16.msra.mxu0 0
      %593 = vmatprep.subr.bf16.mxu0 0
      %594 = vmatpush1.bf16.msra.mxu0 0
      %595 = vmatprep.subr.bf16.mxu0 0
      %596 = vmatpush1.bf16.msra.mxu0 0
      %597 = vmatprep.subr.bf16.mxu0 %v578
      %598 = vmatpush1.bf16.msra.mxu0 %v575
      %599 = vmatprep.subr.bf16.mxu0 0
      %600 = vmatpush2.bf16.msra.mxu0 0
      %601 = vmatprep.subr.bf16.mxu0 0
      %602 = vmatpush2.bf16.msra.mxu0 0
      %603 = vmatprep.subr.bf16.mxu0 0
      %604 = vmatpush2.bf16.msra.mxu0 0
      %605 = vmatprep.subr.bf16.mxu0 0
      %606 = vmatpush2.bf16.msra.mxu0 0
      %607 = vmatprep.subr.bf16.mxu0 0
      %608 = vmatpush2.bf16.msra.mxu0 0
      %609 = vmatprep.subr.bf16.mxu0 0
      %610 = vmatpush2.bf16.msra.mxu0 0
      %611 = vmatprep.subr.bf16.mxu0 0
      %612 = vmatpush2.bf16.msra.mxu0 0
      %613 = vmatprep.subr.bf16.mxu0 0
      %614 = vmatpush2.bf16.msra.mxu0 0
      %615 = vmatprep.mubr.bf16.mxu0 0
      %616 = vmatmul.mubr.bf16.gmra.mxu0 %v572
      %v617 = vpop.f32.mrf.mxu0
      %v618 = vadd.f32 0.0, %v617
      %v619 = vpop.f32.mrf.mxu0
      %v620 = vadd.f32 0.0, %v619
      %v621 = vpop.f32.mrf.mxu0
      %v622 = vpop.f32.mrf.mxu0
      %623 = vdwg.mxu0
      %624 = vmatprep.subr.bf16.mxu0 0
      %625 = vmatpush1.bf16.msra.mxu0 0
      %626 = vmatprep.subr.bf16.mxu0 0
      %627 = vmatpush1.bf16.msra.mxu0 0
      %628 = vmatprep.subr.bf16.mxu0 0
      %629 = vmatpush1.bf16.msra.mxu0 0
      %630 = vmatprep.subr.bf16.mxu0 0
      %631 = vmatpush1.bf16.msra.mxu0 0
      %632 = vmatprep.subr.bf16.mxu0 0
      %633 = vmatpush1.bf16.msra.mxu0 0
      %634 = vmatprep.subr.bf16.mxu0 0
      %635 = vmatpush1.bf16.msra.mxu0 0
      %636 = vmatprep.subr.bf16.mxu0 0
      %637 = vmatpush1.bf16.msra.mxu0 0
      %638 = vmatprep.subr.bf16.mxu0 0
      %639 = vmatpush1.bf16.msra.mxu0 %v581
      %640 = vmatprep.subr.bf16.mxu0 0
      %641 = vmatpush2.bf16.msra.mxu0 0
      %642 = vmatprep.subr.bf16.mxu0 0
      %643 = vmatpush2.bf16.msra.mxu0 0
      %644 = vmatprep.subr.bf16.mxu0 0
      %645 = vmatpush2.bf16.msra.mxu0 0
      %646 = vmatprep.subr.bf16.mxu0 0
      %647 = vmatpush2.bf16.msra.mxu0 0
      %648 = vmatprep.subr.bf16.mxu0 0
      %649 = vmatpush2.bf16.msra.mxu0 0
      %650 = vmatprep.subr.bf16.mxu0 0
      %651 = vmatpush2.bf16.msra.mxu0 0
      %652 = vmatprep.subr.bf16.mxu0 0
      %653 = vmatpush2.bf16.msra.mxu0 0
      %654 = vmatprep.subr.bf16.mxu0 0
      %655 = vmatpush2.bf16.msra.mxu0 0
      %656 = vmatprep.mubr.bf16.mxu0 0
      %657 = vmatmul.mubr.bf16.gmra.mxu0 %v572
      %v658 = vpop.f32.mrf.mxu0
      %v659 = vadd.f32 0.0, %v658
      %v660 = vpop.f32.mrf.mxu0
      %v661 = vpop.f32.mrf.mxu0
      %v662 = vpop.f32.mrf.mxu0
      %663 = vdwg.mxu0
      %v664 = vadd.f32 %v539, %v618
      %v665 = vadd.f32 %v540, %v620
      %v666 = vadd.f32 %v541, %v659
      %v667 = vld [vmem:[%s192] sm:$0x3f]
      %s668 = scalar_lea.vmem %s1, 16
      %v669 = vld [vmem:[%s668] sm:$0xf]
      %v671 = vcombine.high %v667, %v667
      %v673 = vunpack.c.l.s4 1983009808
      %v674 = vunpack.c.0.s8 %v673
      %v675 = vlaneseq
      %v676 = vshrl.u32 %v675, 7
      %v677 = vsub.s32 %v674, %v676
      %v678 = vrot.slane %v667, %v677
      %v680 = vunpack.c.l.s4 1983009808
      %v681 = vunpack.c.0.s8 %v680
      %v682 = vlaneseq
      %v683 = vshrl.u32 %v682, 7
      %v684 = vsub.s32 %v681, %v683
      %v685 = vrot.slane %v671, %v684
      %v686 = vcombine.high %v678, %v678
      %687 = vrot.lane.b32.xlu0 %v678, 109
      %v688 = vpop.permute.xlu0 %687
      %689 = vrot.lane.b32.xlu0 %v686, 109
      %v690 = vpop.permute.xlu0 %689
      %691 = vrot.lane.b32.xlu0 %v685, 109
      %v692 = vpop.permute.xlu0 %691
      %vm693 = vcmask 891904
      %v694 = vsel %vm693, %v688, %v690
      %v695 = vsel %vm693, %v690, %v692
      %v697 = vsel %vm229, %v669, 0
      %v700 = vsel %vm233, %v694, 0
      %v703 = vsel %vm233, %v695, 0
      %v706 = vsel %vm233, %v692, 0
      %708 = vmatprep.subr.bf16.mxu0 0
      %709 = vmatpush1.bf16.msra.mxu0 0
      %710 = vmatprep.subr.bf16.mxu0 0
      %711 = vmatpush1.bf16.msra.mxu0 0
      %712 = vmatprep.subr.bf16.mxu0 0
      %713 = vmatpush1.bf16.msra.mxu0 0
      %714 = vmatprep.subr.bf16.mxu0 0
      %715 = vmatpush1.bf16.msra.mxu0 0
      %716 = vmatprep.subr.bf16.mxu0 0
      %717 = vmatpush1.bf16.msra.mxu0 0
      %718 = vmatprep.subr.bf16.mxu0 0
      %719 = vmatpush1.bf16.msra.mxu0 0
      %720 = vmatprep.subr.bf16.mxu0 0
      %721 = vmatpush1.bf16.msra.mxu0 0
      %722 = vmatprep.subr.bf16.mxu0 %v703
      %723 = vmatpush1.bf16.msra.mxu0 %v700
      %724 = vmatprep.subr.bf16.mxu0 0
      %725 = vmatpush2.bf16.msra.mxu0 0
      %726 = vmatprep.subr.bf16.mxu0 0
      %727 = vmatpush2.bf16.msra.mxu0 0
      %728 = vmatprep.subr.bf16.mxu0 0
      %729 = vmatpush2.bf16.msra.mxu0 0
      %730 = vmatprep.subr.bf16.mxu0 0
      %731 = vmatpush2.bf16.msra.mxu0 0
      %732 = vmatprep.subr.bf16.mxu0 0
      %733 = vmatpush2.bf16.msra.mxu0 0
      %734 = vmatprep.subr.bf16.mxu0 0
      %735 = vmatpush2.bf16.msra.mxu0 0
      %736 = vmatprep.subr.bf16.mxu0 0
      %737 = vmatpush2.bf16.msra.mxu0 0
      %738 = vmatprep.subr.bf16.mxu0 0
      %739 = vmatpush2.bf16.msra.mxu0 0
      %740 = vmatprep.mubr.bf16.mxu0 0
      %741 = vmatmul.mubr.bf16.gmra.mxu0 %v697
      %v742 = vpop.f32.mrf.mxu0
      %v743 = vadd.f32 0.0, %v742
      %v744 = vpop.f32.mrf.mxu0
      %v745 = vadd.f32 0.0, %v744
      %v746 = vpop.f32.mrf.mxu0
      %v747 = vpop.f32.mrf.mxu0
      %748 = vdwg.mxu0
      %749 = vmatprep.subr.bf16.mxu0 0
      %750 = vmatpush1.bf16.msra.mxu0 0
      %751 = vmatprep.subr.bf16.mxu0 0
      %752 = vmatpush1.bf16.msra.mxu0 0
      %753 = vmatprep.subr.bf16.mxu0 0
      %754 = vmatpush1.bf16.msra.mxu0 0
      %755 = vmatprep.subr.bf16.mxu0 0
      %756 = vmatpush1.bf16.msra.mxu0 0
      %757 = vmatprep.subr.bf16.mxu0 0
      %758 = vmatpush1.bf16.msra.mxu0 0
      %759 = vmatprep.subr.bf16.mxu0 0
      %760 = vmatpush1.bf16.msra.mxu0 0
      %761 = vmatprep.subr.bf16.mxu0 0
      %762 = vmatpush1.bf16.msra.mxu0 0
      %763 = vmatprep.subr.bf16.mxu0 0
      %764 = vmatpush1.bf16.msra.mxu0 %v706
      %765 = vmatprep.subr.bf16.mxu0 0
      %766 = vmatpush2.bf16.msra.mxu0 0
      %767 = vmatprep.subr.bf16.mxu0 0
      %768 = vmatpush2.bf16.msra.mxu0 0
      %769 = vmatprep.subr.bf16.mxu0 0
      %770 = vmatpush2.bf16.msra.mxu0 0
      %771 = vmatprep.subr.bf16.mxu0 0
      %772 = vmatpush2.bf16.msra.mxu0 0
      %773 = vmatprep.subr.bf16.mxu0 0
      %774 = vmatpush2.bf16.msra.mxu0 0
      %775 = vmatprep.subr.bf16.mxu0 0
      %776 = vmatpush2.bf16.msra.mxu0 0
      %777 = vmatprep.subr.bf16.mxu0 0
      %778 = vmatpush2.bf16.msra.mxu0 0
      %779 = vmatprep.subr.bf16.mxu0 0
      %780 = vmatpush2.bf16.msra.mxu0 0
      %781 = vmatprep.mubr.bf16.mxu0 0
      %782 = vmatmul.mubr.bf16.gmra.mxu0 %v697
      %v783 = vpop.f32.mrf.mxu0
      %v784 = vadd.f32 0.0, %v783
      %v785 = vpop.f32.mrf.mxu0
      %v786 = vpop.f32.mrf.mxu0
      %v787 = vpop.f32.mrf.mxu0
      %788 = vdwg.mxu0
      %v789 = vadd.f32 %v664, %v743
      %v790 = vadd.f32 %v665, %v745
      %v791 = vadd.f32 %v666, %v784
      %v792 = vld [vmem:[%s192] sm:$0x3f]
      %s793 = scalar_lea.vmem %s1, 20
      %v794 = vld [vmem:[%s793] sm:$0xf]
      %v796 = vcombine.high %v792, %v792
      %v798 = vunpack.c.l.s4 1983009808
      %v799 = vunpack.c.0.s8 %v798
      %v800 = vlaneseq
      %v801 = vshrl.u32 %v800, 7
      %v802 = vsub.s32 %v799, %v801
      %v803 = vrot.slane %v792, %v802
      %v805 = vunpack.c.l.s4 1983009808
      %v806 = vunpack.c.0.s8 %v805
      %v807 = vlaneseq
      %v808 = vshrl.u32 %v807, 7
      %v809 = vsub.s32 %v806, %v808
      %v810 = vrot.slane %v796, %v809
      %v811 = vcombine.high %v803, %v803
      %812 = vrot.lane.b32.xlu0 %v803, 108
      %v813 = vpop.permute.xlu0 %812
      %814 = vrot.lane.b32.xlu0 %v811, 108
      %v815 = vpop.permute.xlu0 %814
      %816 = vrot.lane.b32.xlu0 %v810, 108
      %v817 = vpop.permute.xlu0 %816
      %vm818 = vcmask 883712
      %v819 = vsel %vm818, %v813, %v815
      %v820 = vsel %vm818, %v815, %v817
      %v822 = vsel %vm229, %v794, 0
      %v825 = vsel %vm233, %v819, 0
      %v828 = vsel %vm233, %v820, 0
      %v831 = vsel %vm233, %v817, 0
      %833 = vmatprep.subr.bf16.mxu0 0
      %834 = vmatpush1.bf16.msra.mxu0 0
      %835 = vmatprep.subr.bf16.mxu0 0
      %836 = vmatpush1.bf16.msra.mxu0 0
      %837 = vmatprep.subr.bf16.mxu0 0
      %838 = vmatpush1.bf16.msra.mxu0 0
      %839 = vmatprep.subr.bf16.mxu0 0
      %840 = vmatpush1.bf16.msra.mxu0 0
      %841 = vmatprep.subr.bf16.mxu0 0
      %842 = vmatpush1.bf16.msra.mxu0 0
      %843 = vmatprep.subr.bf16.mxu0 0
      %844 = vmatpush1.bf16.msra.mxu0 0
      %845 = vmatprep.subr.bf16.mxu0 0
      %846 = vmatpush1.bf16.msra.mxu0 0
      %847 = vmatprep.subr.bf16.mxu0 %v828
      %848 = vmatpush1.bf16.msra.mxu0 %v825
      %849 = vmatprep.subr.bf16.mxu0 0
      %850 = vmatpush2.bf16.msra.mxu0 0
      %851 = vmatprep.subr.bf16.mxu0 0
      %852 = vmatpush2.bf16.msra.mxu0 0
      %853 = vmatprep.subr.bf16.mxu0 0
      %854 = vmatpush2.bf16.msra.mxu0 0
      %855 = vmatprep.subr.bf16.mxu0 0
      %856 = vmatpush2.bf16.msra.mxu0 0
      %857 = vmatprep.subr.bf16.mxu0 0
      %858 = vmatpush2.bf16.msra.mxu0 0
      %859 = vmatprep.subr.bf16.mxu0 0
      %860 = vmatpush2.bf16.msra.mxu0 0
      %861 = vmatprep.subr.bf16.mxu0 0
      %862 = vmatpush2.bf16.msra.mxu0 0
      %863 = vmatprep.subr.bf16.mxu0 0
      %864 = vmatpush2.bf16.msra.mxu0 0
      %865 = vmatprep.mubr.bf16.mxu0 0
      %866 = vmatmul.mubr.bf16.gmra.mxu0 %v822
      %v867 = vpop.f32.mrf.mxu0
      %v868 = vadd.f32 0.0, %v867
      %v869 = vpop.f32.mrf.mxu0
      %v870 = vadd.f32 0.0, %v869
      %v871 = vpop.f32.mrf.mxu0
      %v872 = vpop.f32.mrf.mxu0
      %873 = vdwg.mxu0
      %874 = vmatprep.subr.bf16.mxu0 0
      %875 = vmatpush1.bf16.msra.mxu0 0
      %876 = vmatprep.subr.bf16.mxu0 0
      %877 = vmatpush1.bf16.msra.mxu0 0
      %878 = vmatprep.subr.bf16.mxu0 0
      %879 = vmatpush1.bf16.msra.mxu0 0
      %880 = vmatprep.subr.bf16.mxu0 0
      %881 = vmatpush1.bf16.msra.mxu0 0
      %882 = vmatprep.subr.bf16.mxu0 0
      %883 = vmatpush1.bf16.msra.mxu0 0
      %884 = vmatprep.subr.bf16.mxu0 0
      %885 = vmatpush1.bf16.msra.mxu0 0
      %886 = vmatprep.subr.bf16.mxu0 0
      %887 = vmatpush1.bf16.msra.mxu0 0
      %888 = vmatprep.subr.bf16.mxu0 0
      %889 = vmatpush1.bf16.msra.mxu0 %v831
      %890 = vmatprep.subr.bf16.mxu0 0
      %891 = vmatpush2.bf16.msra.mxu0 0
      %892 = vmatprep.subr.bf16.mxu0 0
      %893 = vmatpush2.bf16.msra.mxu0 0
      %894 = vmatprep.subr.bf16.mxu0 0
      %895 = vmatpush2.bf16.msra.mxu0 0
      %896 = vmatprep.subr.bf16.mxu0 0
      %897 = vmatpush2.bf16.msra.mxu0 0
      %898 = vmatprep.subr.bf16.mxu0 0
      %899 = vmatpush2.bf16.msra.mxu0 0
      %900 = vmatprep.subr.bf16.mxu0 0
      %901 = vmatpush2.bf16.msra.mxu0 0
      %902 = vmatprep.subr.bf16.mxu0 0
      %903 = vmatpush2.bf16.msra.mxu0 0
      %904 = vmatprep.subr.bf16.mxu0 0
      %905 = vmatpush2.bf16.msra.mxu0 0
      %906 = vmatprep.mubr.bf16.mxu0 0
      %907 = vmatmul.mubr.bf16.gmra.mxu0 %v822
      %v908 = vpop.f32.mrf.mxu0
      %v909 = vadd.f32 0.0, %v908
      %v910 = vpop.f32.mrf.mxu0
      %v911 = vpop.f32.mrf.mxu0
      %v912 = vpop.f32.mrf.mxu0
      %913 = vdwg.mxu0
      %v914 = vadd.f32 %v789, %v868
      %v915 = vadd.f32 %v790, %v870
      %v916 = vadd.f32 %v791, %v909
      %v917 = vld [vmem:[%s192] sm:$0x3f]
      %s918 = scalar_lea.vmem %s1, 24
      %v919 = vld [vmem:[%s918] sm:$0xf]
      %v921 = vcombine.high %v917, %v917
      %v923 = vunpack.c.l.s4 1983009808
      %v924 = vunpack.c.0.s8 %v923
      %v925 = vlaneseq
      %v926 = vshrl.u32 %v925, 7
      %v927 = vsub.s32 %v924, %v926
      %v928 = vrot.slane %v917, %v927
      %v930 = vunpack.c.l.s4 1983009808
      %v931 = vunpack.c.0.s8 %v930
      %v932 = vlaneseq
      %v933 = vshrl.u32 %v932, 7
      %v934 = vsub.s32 %v931, %v933
      %v935 = vrot.slane %v921, %v934
      %v936 = vcombine.high %v928, %v928
      %937 = vrot.lane.b32.xlu0 %v928, 92
      %v938 = vpop.permute.xlu0 %937
      %939 = vrot.lane.b32.xlu0 %v936, 92
      %v940 = vpop.permute.xlu0 %939
      %941 = vrot.lane.b32.xlu0 %v935, 92
      %v942 = vpop.permute.xlu0 %941
      %vm943 = vcmask 752640
      %v944 = vsel %vm943, %v938, %v940
      %v945 = vsel %vm943, %v940, %v942
      %v947 = vsel %vm229, %v919, 0
      %v950 = vsel %vm233, %v944, 0
      %v953 = vsel %vm233, %v945, 0
      %v956 = vsel %vm233, %v942, 0
      %958 = vmatprep.subr.bf16.mxu0 0
      %959 = vmatpush1.bf16.msra.mxu0 0
      %960 = vmatprep.subr.bf16.mxu0 0
      %961 = vmatpush1.bf16.msra.mxu0 0
      %962 = vmatprep.subr.bf16.mxu0 0
      %963 = vmatpush1.bf16.msra.mxu0 0
      %964 = vmatprep.subr.bf16.mxu0 0
      %965 = vmatpush1.bf16.msra.mxu0 0
      %966 = vmatprep.subr.bf16.mxu0 0
      %967 = vmatpush1.bf16.msra.mxu0 0
      %968 = vmatprep.subr.bf16.mxu0 0
      %969 = vmatpush1.bf16.msra.mxu0 0
      %970 = vmatprep.subr.bf16.mxu0 0
      %971 = vmatpush1.bf16.msra.mxu0 0
      %972 = vmatprep.subr.bf16.mxu0 %v953
      %973 = vmatpush1.bf16.msra.mxu0 %v950
      %974 = vmatprep.subr.bf16.mxu0 0
      %975 = vmatpush2.bf16.msra.mxu0 0
      %976 = vmatprep.subr.bf16.mxu0 0
      %977 = vmatpush2.bf16.msra.mxu0 0
      %978 = vmatprep.subr.bf16.mxu0 0
      %979 = vmatpush2.bf16.msra.mxu0 0
      %980 = vmatprep.subr.bf16.mxu0 0
      %981 = vmatpush2.bf16.msra.mxu0 0
      %982 = vmatprep.subr.bf16.mxu0 0
      %983 = vmatpush2.bf16.msra.mxu0 0
      %984 = vmatprep.subr.bf16.mxu0 0
      %985 = vmatpush2.bf16.msra.mxu0 0
      %986 = vmatprep.subr.bf16.mxu0 0
      %987 = vmatpush2.bf16.msra.mxu0 0
      %988 = vmatprep.subr.bf16.mxu0 0
      %989 = vmatpush2.bf16.msra.mxu0 0
      %990 = vmatprep.mubr.bf16.mxu0 0
      %991 = vmatmul.mubr.bf16.gmra.mxu0 %v947
      %v992 = vpop.f32.mrf.mxu0
      %v993 = vadd.f32 0.0, %v992
      %v994 = vpop.f32.mrf.mxu0
      %v995 = vadd.f32 0.0, %v994
      %v996 = vpop.f32.mrf.mxu0
      %v997 = vpop.f32.mrf.mxu0
      %998 = vdwg.mxu0
      %999 = vmatprep.subr.bf16.mxu0 0
      %1000 = vmatpush1.bf16.msra.mxu0 0
      %1001 = vmatprep.subr.bf16.mxu0 0
      %1002 = vmatpush1.bf16.msra.mxu0 0
      %1003 = vmatprep.subr.bf16.mxu0 0
      %1004 = vmatpush1.bf16.msra.mxu0 0
      %1005 = vmatprep.subr.bf16.mxu0 0
      %1006 = vmatpush1.bf16.msra.mxu0 0
      %1007 = vmatprep.subr.bf16.mxu0 0
      %1008 = vmatpush1.bf16.msra.mxu0 0
      %1009 = vmatprep.subr.bf16.mxu0 0
      %1010 = vmatpush1.bf16.msra.mxu0 0
      %1011 = vmatprep.subr.bf16.mxu0 0
      %1012 = vmatpush1.bf16.msra.mxu0 0
      %1013 = vmatprep.subr.bf16.mxu0 0
      %1014 = vmatpush1.bf16.msra.mxu0 %v956
      %1015 = vmatprep.subr.bf16.mxu0 0
      %1016 = vmatpush2.bf16.msra.mxu0 0
      %1017 = vmatprep.subr.bf16.mxu0 0
      %1018 = vmatpush2.bf16.msra.mxu0 0
      %1019 = vmatprep.subr.bf16.mxu0 0
      %1020 = vmatpush2.bf16.msra.mxu0 0
      %1021 = vmatprep.subr.bf16.mxu0 0
      %1022 = vmatpush2.bf16.msra.mxu0 0
      %1023 = vmatprep.subr.bf16.mxu0 0
      %1024 = vmatpush2.bf16.msra.mxu0 0
      %1025 = vmatprep.subr.bf16.mxu0 0
      %1026 = vmatpush2.bf16.msra.mxu0 0
      %1027 = vmatprep.subr.bf16.mxu0 0
      %1028 = vmatpush2.bf16.msra.mxu0 0
      %1029 = vmatprep.subr.bf16.mxu0 0
      %1030 = vmatpush2.bf16.msra.mxu0 0
      %1031 = vmatprep.mubr.bf16.mxu0 0
      %1032 = vmatmul.mubr.bf16.gmra.mxu0 %v947
      %v1033 = vpop.f32.mrf.mxu0
      %v1034 = vadd.f32 0.0, %v1033
      %v1035 = vpop.f32.mrf.mxu0
      %v1036 = vpop.f32.mrf.mxu0
      %v1037 = vpop.f32.mrf.mxu0
      %1038 = vdwg.mxu0
      %v1039 = vadd.f32 %v914, %v993
      %v1040 = vadd.f32 %v915, %v995
      %v1041 = vadd.f32 %v916, %v1034
      %v1042 = vld [vmem:[%s192] sm:$0x3f]
      %s1043 = scalar_lea.vmem %s1, 28
      %v1044 = vld [vmem:[%s1043] sm:$0xf]
      %v1046 = vcombine.high %v1042, %v1042
      %v1048 = vunpack.c.l.s4 1983009808
      %v1049 = vunpack.c.0.s8 %v1048
      %v1050 = vlaneseq
      %v1051 = vshrl.u32 %v1050, 7
      %v1052 = vsub.s32 %v1049, %v1051
      %v1053 = vrot.slane %v1042, %v1052
      %v1055 = vunpack.c.l.s4 1983009808
      %v1056 = vunpack.c.0.s8 %v1055
      %v1057 = vlaneseq
      %v1058 = vshrl.u32 %v1057, 7
      %v1059 = vsub.s32 %v1056, %v1058
      %v1060 = vrot.slane %v1046, %v1059
      %v1061 = vcombine.high %v1053, %v1053
      %1062 = vrot.lane.b32.xlu0 %v1053, 91
      %v1063 = vpop.permute.xlu0 %1062
      %1064 = vrot.lane.b32.xlu0 %v1061, 91
      %v1065 = vpop.permute.xlu0 %1064
      %1066 = vrot.lane.b32.xlu0 %v1060, 91
      %v1067 = vpop.permute.xlu0 %1066
      %vm1068 = vcmask 744448
      %v1069 = vsel %vm1068, %v1063, %v1065
      %v1070 = vsel %vm1068, %v1065, %v1067
      %v1072 = vsel %vm229, %v1044, 0
      %v1075 = vsel %vm233, %v1069, 0
      %v1078 = vsel %vm233, %v1070, 0
      %v1081 = vsel %vm233, %v1067, 0
      %1083 = vmatprep.subr.bf16.mxu0 0
      %1084 = vmatpush1.bf16.msra.mxu0 0
      %1085 = vmatprep.subr.bf16.mxu0 0
      %1086 = vmatpush1.bf16.msra.mxu0 0
      %1087 = vmatprep.subr.bf16.mxu0 0
      %1088 = vmatpush1.bf16.msra.mxu0 0
      %1089 = vmatprep.subr.bf16.mxu0 0
      %1090 = vmatpush1.bf16.msra.mxu0 0
      %1091 = vmatprep.subr.bf16.mxu0 0
      %1092 = vmatpush1.bf16.msra.mxu0 0
      %1093 = vmatprep.subr.bf16.mxu0 0
      %1094 = vmatpush1.bf16.msra.mxu0 0
      %1095 = vmatprep.subr.bf16.mxu0 0
      %1096 = vmatpush1.bf16.msra.mxu0 0
      %1097 = vmatprep.subr.bf16.mxu0 %v1078
      %1098 = vmatpush1.bf16.msra.mxu0 %v1075
      %1099 = vmatprep.subr.bf16.mxu0 0
      %1100 = vmatpush2.bf16.msra.mxu0 0
      %1101 = vmatprep.subr.bf16.mxu0 0
      %1102 = vmatpush2.bf16.msra.mxu0 0
      %1103 = vmatprep.subr.bf16.mxu0 0
      %1104 = vmatpush2.bf16.msra.mxu0 0
      %1105 = vmatprep.subr.bf16.mxu0 0
      %1106 = vmatpush2.bf16.msra.mxu0 0
      %1107 = vmatprep.subr.bf16.mxu0 0
      %1108 = vmatpush2.bf16.msra.mxu0 0
      %1109 = vmatprep.subr.bf16.mxu0 0
      %1110 = vmatpush2.bf16.msra.mxu0 0
      %1111 = vmatprep.subr.bf16.mxu0 0
      %1112 = vmatpush2.bf16.msra.mxu0 0
      %1113 = vmatprep.subr.bf16.mxu0 0
      %1114 = vmatpush2.bf16.msra.mxu0 0
      %1115 = vmatprep.mubr.bf16.mxu0 0
      %1116 = vmatmul.mubr.bf16.gmra.mxu0 %v1072
      %v1117 = vpop.f32.mrf.mxu0
      %v1118 = vadd.f32 0.0, %v1117
      %v1119 = vpop.f32.mrf.mxu0
      %v1120 = vadd.f32 0.0, %v1119
      %v1121 = vpop.f32.mrf.mxu0
      %v1122 = vpop.f32.mrf.mxu0
      %1123 = vdwg.mxu0
      %1124 = vmatprep.subr.bf16.mxu0 0
      %1125 = vmatpush1.bf16.msra.mxu0 0
      %1126 = vmatprep.subr.bf16.mxu0 0
      %1127 = vmatpush1.bf16.msra.mxu0 0
      %1128 = vmatprep.subr.bf16.mxu0 0
      %1129 = vmatpush1.bf16.msra.mxu0 0
      %1130 = vmatprep.subr.bf16.mxu0 0
      %1131 = vmatpush1.bf16.msra.mxu0 0
      %1132 = vmatprep.subr.bf16.mxu0 0
      %1133 = vmatpush1.bf16.msra.mxu0 0
      %1134 = vmatprep.subr.bf16.mxu0 0
      %1135 = vmatpush1.bf16.msra.mxu0 0
      %1136 = vmatprep.subr.bf16.mxu0 0
      %1137 = vmatpush1.bf16.msra.mxu0 0
      %1138 = vmatprep.subr.bf16.mxu0 0
      %1139 = vmatpush1.bf16.msra.mxu0 %v1081
      %1140 = vmatprep.subr.bf16.mxu0 0
      %1141 = vmatpush2.bf16.msra.mxu0 0
      %1142 = vmatprep.subr.bf16.mxu0 0
      %1143 = vmatpush2.bf16.msra.mxu0 0
      %1144 = vmatprep.subr.bf16.mxu0 0
      %1145 = vmatpush2.bf16.msra.mxu0 0
      %1146 = vmatprep.subr.bf16.mxu0 0
      %1147 = vmatpush2.bf16.msra.mxu0 0
      %1148 = vmatprep.subr.bf16.mxu0 0
      %1149 = vmatpush2.bf16.msra.mxu0 0
      %1150 = vmatprep.subr.bf16.mxu0 0
      %1151 = vmatpush2.bf16.msra.mxu0 0
      %1152 = vmatprep.subr.bf16.mxu0 0
      %1153 = vmatpush2.bf16.msra.mxu0 0
      %1154 = vmatprep.subr.bf16.mxu0 0
      %1155 = vmatpush2.bf16.msra.mxu0 0
      %1156 = vmatprep.mubr.bf16.mxu0 0
      %1157 = vmatmul.mubr.bf16.gmra.mxu0 %v1072
      %v1158 = vpop.f32.mrf.mxu0
      %v1159 = vadd.f32 0.0, %v1158
      %v1160 = vpop.f32.mrf.mxu0
      %v1161 = vpop.f32.mrf.mxu0
      %v1162 = vpop.f32.mrf.mxu0
      %1163 = vdwg.mxu0
      %v1164 = vadd.f32 %v1039, %v1118
      %v1165 = vadd.f32 %v1040, %v1120
      %v1166 = vadd.f32 %v1041, %v1159
      %v1167 = vld [vmem:[%s192] sm:$0x3f]
      %s1168 = scalar_lea.vmem %s1, 32
      %v1169 = vld [vmem:[%s1168] sm:$0xf]
      %v1171 = vcombine.high %v1167, %v1167
      %v1173 = vunpack.c.l.s4 1983009808
      %v1174 = vunpack.c.0.s8 %v1173
      %v1175 = vlaneseq
      %v1176 = vshrl.u32 %v1175, 7
      %v1177 = vsub.s32 %v1174, %v1176
      %v1178 = vrot.slane %v1167, %v1177
      %v1180 = vunpack.c.l.s4 1983009808
      %v1181 = vunpack.c.0.s8 %v1180
      %v1182 = vlaneseq
      %v1183 = vshrl.u32 %v1182, 7
      %v1184 = vsub.s32 %v1181, %v1183
      %v1185 = vrot.slane %v1171, %v1184
      %v1186 = vcombine.high %v1178, %v1178
      %1187 = vrot.lane.b32.xlu0 %v1178, 90
      %v1188 = vpop.permute.xlu0 %1187
      %1189 = vrot.lane.b32.xlu0 %v1186, 90
      %v1190 = vpop.permute.xlu0 %1189
      %1191 = vrot.lane.b32.xlu0 %v1185, 90
      %v1192 = vpop.permute.xlu0 %1191
      %vm1193 = vcmask 736256
      %v1194 = vsel %vm1193, %v1188, %v1190
      %v1195 = vsel %vm1193, %v1190, %v1192
      %v1197 = vsel %vm229, %v1169, 0
      %v1200 = vsel %vm233, %v1194, 0
      %v1203 = vsel %vm233, %v1195, 0
      %v1206 = vsel %vm233, %v1192, 0
      %1208 = vmatprep.subr.bf16.mxu0 0
      %1209 = vmatpush1.bf16.msra.mxu0 0
      %1210 = vmatprep.subr.bf16.mxu0 0
      %1211 = vmatpush1.bf16.msra.mxu0 0
      %1212 = vmatprep.subr.bf16.mxu0 0
      %1213 = vmatpush1.bf16.msra.mxu0 0
      %1214 = vmatprep.subr.bf16.mxu0 0
      %1215 = vmatpush1.bf16.msra.mxu0 0
      %1216 = vmatprep.subr.bf16.mxu0 0
      %1217 = vmatpush1.bf16.msra.mxu0 0
      %1218 = vmatprep.subr.bf16.mxu0 0
      %1219 = vmatpush1.bf16.msra.mxu0 0
      %1220 = vmatprep.subr.bf16.mxu0 0
      %1221 = vmatpush1.bf16.msra.mxu0 0
      %1222 = vmatprep.subr.bf16.mxu0 %v1203
      %1223 = vmatpush1.bf16.msra.mxu0 %v1200
      %1224 = vmatprep.subr.bf16.mxu0 0
      %1225 = vmatpush2.bf16.msra.mxu0 0
      %1226 = vmatprep.subr.bf16.mxu0 0
      %1227 = vmatpush2.bf16.msra.mxu0 0
      %1228 = vmatprep.subr.bf16.mxu0 0
      %1229 = vmatpush2.bf16.msra.mxu0 0
      %1230 = vmatprep.subr.bf16.mxu0 0
      %1231 = vmatpush2.bf16.msra.mxu0 0
      %1232 = vmatprep.subr.bf16.mxu0 0
      %1233 = vmatpush2.bf16.msra.mxu0 0
      %1234 = vmatprep.subr.bf16.mxu0 0
      %1235 = vmatpush2.bf16.msra.mxu0 0
      %1236 = vmatprep.subr.bf16.mxu0 0
      %1237 = vmatpush2.bf16.msra.mxu0 0
      %1238 = vmatprep.subr.bf16.mxu0 0
      %1239 = vmatpush2.bf16.msra.mxu0 0
      %1240 = vmatprep.mubr.bf16.mxu0 0
      %1241 = vmatmul.mubr.bf16.gmra.mxu0 %v1197
      %v1242 = vpop.f32.mrf.mxu0
      %v1243 = vadd.f32 0.0, %v1242
      %v1244 = vpop.f32.mrf.mxu0
      %v1245 = vadd.f32 0.0, %v1244
      %v1246 = vpop.f32.mrf.mxu0
      %v1247 = vpop.f32.mrf.mxu0
      %1248 = vdwg.mxu0
      %1249 = vmatprep.subr.bf16.mxu0 0
      %1250 = vmatpush1.bf16.msra.mxu0 0
      %1251 = vmatprep.subr.bf16.mxu0 0
      %1252 = vmatpush1.bf16.msra.mxu0 0
      %1253 = vmatprep.subr.bf16.mxu0 0
      %1254 = vmatpush1.bf16.msra.mxu0 0
      %1255 = vmatprep.subr.bf16.mxu0 0
      %1256 = vmatpush1.bf16.msra.mxu0 0
      %1257 = vmatprep.subr.bf16.mxu0 0
      %1258 = vmatpush1.bf16.msra.mxu0 0
      %1259 = vmatprep.subr.bf16.mxu0 0
      %1260 = vmatpush1.bf16.msra.mxu0 0
      %1261 = vmatprep.subr.bf16.mxu0 0
      %1262 = vmatpush1.bf16.msra.mxu0 0
      %1263 = vmatprep.subr.bf16.mxu0 0
      %1264 = vmatpush1.bf16.msra.mxu0 %v1206
      %1265 = vmatprep.subr.bf16.mxu0 0
      %1266 = vmatpush2.bf16.msra.mxu0 0
      %1267 = vmatprep.subr.bf16.mxu0 0
      %1268 = vmatpush2.bf16.msra.mxu0 0
      %1269 = vmatprep.subr.bf16.mxu0 0
      %1270 = vmatpush2.bf16.msra.mxu0 0
      %1271 = vmatprep.subr.bf16.mxu0 0
      %1272 = vmatpush2.bf16.msra.mxu0 0
      %1273 = vmatprep.subr.bf16.mxu0 0
      %1274 = vmatpush2.bf16.msra.mxu0 0
      %1275 = vmatprep.subr.bf16.mxu0 0
      %1276 = vmatpush2.bf16.msra.mxu0 0
      %1277 = vmatprep.subr.bf16.mxu0 0
      %1278 = vmatpush2.bf16.msra.mxu0 0
      %1279 = vmatprep.subr.bf16.mxu0 0
      %1280 = vmatpush2.bf16.msra.mxu0 0
      %1281 = vmatprep.mubr.bf16.mxu0 0
      %1282 = vmatmul.mubr.bf16.gmra.mxu0 %v1197
      %v1283 = vpop.f32.mrf.mxu0
      %v1284 = vadd.f32 0.0, %v1283
      %v1285 = vpop.f32.mrf.mxu0
      %v1286 = vpop.f32.mrf.mxu0
      %v1287 = vpop.f32.mrf.mxu0
      %1288 = vdwg.mxu0
      %v1289 = vadd.f32 %v1164, %v1243
      %v1290 = vadd.f32 %v1165, %v1245
      %v1291 = vadd.f32 %v1166, %v1284
      %v1292 = vld [vmem:[%s2] sm:$0xff]
      %1294 = vset.pattern.permute.xlu0 0
      %1295 = vperm.xlu0 %1294, %v1292
      %v1296 = vpop.permute.xlu0 %1295
      %v1298 = vmul.f32 %v1289, %v1296
      %v1299 = vmul.f32 %v1290, %v1296
      %v1300 = vmul.f32 %v1291, %v1296
      %v1301 = vld [vmem:[%s3] sm:$0xff]
      %1303 = vset.pattern.permute.xlu0 0
      %1304 = vperm.xlu0 %1303, %v1301
      %v1305 = vpop.permute.xlu0 %1304
      %v1307 = vadd.f32 %v1298, %v1305
      %v1308 = vadd.f32 %v1299, %v1305
      %v1309 = vadd.f32 %v1300, %v1305
      %vm1310 = vcmp.ge.f32.partialorder %v1307, 0.0
      %vm1311 = vcmp.ge.f32.partialorder %v1308, 0.0
      %vm1312 = vcmp.ge.f32.partialorder %v1309, 0.0
      %v1313 = vmul.f32 %v1307, 0.1
      %v1314 = vmul.f32 %v1308, 0.1
      %v1315 = vmul.f32 %v1309, 0.1
      %v1316 = vsel %vm1310, %v1307, %v1313
      %v1317 = vsel %vm1311, %v1308, %v1314
      %v1318 = vsel %vm1312, %v1309, %v1315
      %1319 = vst [vmem:[%s197] sm:$0xff] %v1316
      %1320 = vst [vmem:[%s197 + $0x8] sm:$0xff] %v1317
      %vm1321 = vcmask 244736
      %1322 = vst.msk [vmem:[%s197 + $0x10] sm:$0xff] %vm1321, %v1318
      %p1323 = scmp.lt.s32.totalorder %s15, 1
      %s1324 = scalar_select %p1323, %s15, 1
      %s1325 = smul.addr %s1324, 3
      %s1326 = smul.addr %s1325, 8
      %s1327 = scalar_lea.vmem %s4, %s1326
      // Predicated region
      $region37: #{conv_block_forward.1} parent=35 // pred_check
        %p1328 = pneg %p122
      $region38: #{conv_block_forward.1} parent=35 // pred_check_branch
        %1330 = sbr.rel (%p1328) target = $region40
      $region39: #{conv_block_forward.1} parent=35 // pred_region
        _
      $region40: #{conv_block_forward.1} parent=35 // pred_fallthru
        _
    $region36: #{conv_block_forward.1} parent=5 // pred_fallthru
      _
    %p1331 = scmp.le.s32.totalorder 2, %s10
    // Predicated region
    $region41: #{conv_block_forward.1} parent=5 // pred_check
      %p1332 = pneg %p1331
    $region42: #{conv_block_forward.1} parent=5 // pred_check_branch
      %1334 = sbr.rel (%p1332) target = $region44
    $region43: #{conv_block_forward.1} parent=5 // pred_region
      %s1335 = ssub.s32 %s10, 2
      // Predicated region
      $region45: #{conv_block_forward.1} parent=43 // pred_check
        %p1336 = pneg %p128
      $region46: #{conv_block_forward.1} parent=43 // pred_check_branch
        %1338 = sbr.rel (%p1336) target = $region48
      $region47: #{conv_block_forward.1} parent=43 // pred_region
        %p1339 = scmp.lt.s32.totalorder %s16, 1
        %s1340 = scalar_select %p1339, %s16, 1
        %s1341 = smul.addr %s1340, 3
        %s1342 = smul.addr %s1341, 8
        %s1343 = scalar_lea.vmem %s4, %s1342
      $region48: #{conv_block_forward.1} parent=43 // pred_fallthru
        _
    $region44: #{conv_block_forward.1} parent=5 // pred_fallthru
      _
  $region6: #{conv_block_forward.1} parent=0 // loop_footer
    %s14 = sadd.s32 1, %s10
  $region7: #{conv_block_forward.1} parent=0 // loop_footer_branch
    %9 = sbr.rel target = $region3
  $region8: #{conv_block_forward.1} parent=0 // loop_exit
    _

</llo_original>
